<compile_context>
chip_gen: v5e
topology: v5e:2x2
jax: 0.10.0
libtpu: 0.0.40
codegen_flags: <defaults>
</compile_context>

<pallas_src>
import numpy as np
import jax
import jax.numpy as jnp
from jax import lax
from jax.experimental import pallas as pl
from jax.experimental.pallas import tpu as pltpu


# ---------------------------------------------------------------------------
# Fused Pallas kernel (one batch element per grid step)
# ---------------------------------------------------------------------------
def _seb_fused_kernel(hp_ref, lp_ref, wh_ref, wl_ref, a_ref, bexp_ref, b_ref,
                      o_ref):
    """Fused: conv3x3(high) -> bilinear x2 -> + conv3x3(low) -> + bias.

    hp_ref  : [1, Hh+2, (Wh+2)*Ch]  bf16  padded high input, (W,C) lane-flat
    lp_ref  : [1, OH+2, (OW+2)*Cl]  bf16  padded low  input, (W,C) lane-flat
    wh_ref  : [3, (Wh+2)*Ch, Wh*Co] bf16  block-Toeplitz composed high weights
    wl_ref  : [3, (OW+2)*Cl, OW*Co] bf16  block-Toeplitz composed low  weights
    a_ref   : [OH, Hh]              bf16  row-interp matrix (align_corners)
    bexp_ref: [Wh*Co, OW*Co]        bf16  col-interp kron(B^T, I_Co)
    b_ref   : [1, OW*Co]            f32   combined bias, tiled over x
    o_ref   : [1, OH, OW*Co]        f32   output in [row, x*Co+c] layout
    """
    f32 = jnp.float32
    Hh = a_ref.shape[1]
    OH = o_ref.shape[1]

    # ---- high path: composed 3x3 conv as 3 row-block matmuls (K folds kx,Cin)
    hc = jnp.dot(hp_ref[0, 0:Hh, :], wh_ref[0], preferred_element_type=f32)
    hc += jnp.dot(hp_ref[0, 1:1 + Hh, :], wh_ref[1], preferred_element_type=f32)
    hc += jnp.dot(hp_ref[0, 2:2 + Hh, :], wh_ref[2], preferred_element_type=f32)

    # ---- bilinear x2 (align_corners=True) upsample as two matmuls ----------
    up = jnp.dot(a_ref[...], hc.astype(jnp.bfloat16),
                 preferred_element_type=f32)                  # [OH, Wh*Co]
    up = jnp.dot(up.astype(jnp.bfloat16), bexp_ref[...],
                 preferred_element_type=f32)                  # [OH, OW*Co]

    # ---- low path + combined bias, accumulated in f32 ----------------------
    acc = up + b_ref[...]
    acc += jnp.dot(lp_ref[0, 0:OH, :], wl_ref[0], preferred_element_type=f32)
    acc += jnp.dot(lp_ref[0, 1:1 + OH, :], wl_ref[1], preferred_element_type=f32)
    acc += jnp.dot(lp_ref[0, 2:2 + OH, :], wl_ref[2], preferred_element_type=f32)

    # lane-dense store: [OH, OW*Co] = [16, 128] -> unmasked full-vreg stores
    o_ref[0] = acc.astype(o_ref.dtype)


# ---------------------------------------------------------------------------
# Host-side parameter preparation (one time)
# ---------------------------------------------------------------------------
def bilinear_matrix(in_size, out_size):
    """Row-interpolation matrix for bilinear resize with align_corners=True."""
    m = np.zeros((out_size, in_size), np.float32)
    scale = (in_size - 1) / (out_size - 1) if out_size > 1 else 0.0
    for o in range(out_size):
        s = o * scale
        i0 = min(int(np.floor(s)), in_size - 1)
        i1 = min(i0 + 1, in_size - 1)
        f = s - i0
        m[o, i0] += 1.0 - f
        m[o, i1] += f
    return m


def _toeplitz_conv_weights(w, width):
    """w: [3,3,Cin,Cout] -> T: [3, (width+2)*Cin, width*Cout] so that, with the
    padded NHWC input row-block flattened as rows[y, x*Cin+ci],
    sum_ky rows(ky) @ T[ky] is the 'same' 3x3 convolution."""
    _, _, cin, cout = w.shape
    T = np.zeros((3, (width + 2) * cin, width * cout), np.float32)
    for ky in range(3):
        for x in range(width):
            for kx in range(3):
                T[ky, (x + kx) * cin:(x + kx + 1) * cin,
                  x * cout:(x + 1) * cout] = w[ky, kx]
    return T


def conv_param(key, kh, kw, cin, cout):
    k1, k2 = jax.random.split(key)
    bound = 1.0 / np.sqrt(cin * kh * kw)
    w = jax.random.uniform(k1, (kh, kw, cin, cout), jnp.float32, -bound, bound)
    b = jax.random.uniform(k2, (cout,), jnp.float32, -bound, bound)
    return w, b


def init_params(key, high_in, low_in, out_plane):
    ks = jax.random.split(key, 4)
    w3, b3 = conv_param(ks[0], 3, 3, high_in, out_plane)      # conv3x3
    w31, b31 = conv_param(ks[1], 3, 3, low_in, out_plane)     # conv3x31
    w1, b1 = conv_param(ks[2], 1, 1, low_in, out_plane)       # conv1x1
    w11, b11 = conv_param(ks[3], 1, 1, low_in, out_plane)     # conv1x11
    return dict(conv3x3=(w3, b3), conv3x31=(w31, b31),
                conv1x1=(w1, b1), conv1x11=(w11, b11))


def prepare_kernel_params(params, Hh, Wh, Hl, Wl):
    """Fold the 1x1 convs into the 3x3 weights and build the dense matrices
    the fused kernel multiplies with."""
    w3, b3 = params["conv3x3"]
    w31, b31 = params["conv3x31"]
    w1, b1 = params["conv1x1"]
    w11, b11 = params["conv1x11"]

    w3 = np.asarray(w3); b3 = np.asarray(b3)
    w31 = np.asarray(w31); b31 = np.asarray(b31)
    m1 = np.asarray(w1)[0, 0]; b1 = np.asarray(b1)      # [P, Cout]
    m11 = np.asarray(w11)[0, 0]; b11 = np.asarray(b11)  # [P, Cout]

    # conv1x11 o upsample o conv3x3  ==  upsample o conv3x3(w3 @ m11)  (+bias)
    # conv1x1  o conv3x31            ==  conv3x3(w31 @ m1)             (+bias)
    w3c = np.einsum("hwip,pc->hwic", w3, m11).astype(np.float32)
    w31c = np.einsum("hwip,pc->hwic", w31, m1).astype(np.float32)
    # upsample(const) == const (interp rows sum to 1), so both biases can be
    # combined into a single add after the final accumulation.
    b_tot = (b3 @ m11 + b11 + b31 @ m1 + b1).astype(np.float32)   # [Cout]
    cout = int(b_tot.shape[0])

    A = bilinear_matrix(Hh, Hl)                         # [OH, Hh]
    Bm = bilinear_matrix(Wh, Wl)                        # [OW, Wh]
    Bexp = np.kron(Bm.T, np.eye(cout, dtype=np.float32))  # [Wh*Co, OW*Co]

    return dict(
        wh_t=jnp.asarray(_toeplitz_conv_weights(w3c, Wh), jnp.bfloat16),
        wl_t=jnp.asarray(_toeplitz_conv_weights(w31c, Wl), jnp.bfloat16),
        A=jnp.asarray(A, jnp.bfloat16),
        Bexp=jnp.asarray(Bexp, jnp.bfloat16),
        b_tile=jnp.asarray(np.tile(b_tot, Wl)[None, :], jnp.float32),
        cout=cout)


# ---------------------------------------------------------------------------
# Wrapper: NCHW in / NCHW out, single pallas_call, grid over batch
# ---------------------------------------------------------------------------
def sematic_embed_block(high_x_nchw, low_x_nchw, kparams):
    wh_t, wl_t = kparams["wh_t"], kparams["wl_t"]
    A, Bexp, b_tile = kparams["A"], kparams["Bexp"], kparams["b_tile"]
    cout = kparams["cout"]

    B, Ch, Hh, Wh = high_x_nchw.shape
    _, Cl, Hl, Wl = low_x_nchw.shape
    OH, OW = 2 * Hh, 2 * Wh
    assert (OH, OW) == (Hl, Wl)

    def prep(x_nchw):
        # NCHW -> NHWC, pad by 1, flatten (W, C) into the lane dim, bf16.
        x = jnp.transpose(x_nchw, (0, 2, 3, 1))
        x = jnp.pad(x, ((0, 0), (1, 1), (1, 1), (0, 0)))
        b, hp, wp, c = x.shape
        return x.reshape(b, hp, wp * c).astype(jnp.bfloat16)

    hp = prep(high_x_nchw)          # [B, Hh+2, (Wh+2)*Ch]
    lp = prep(low_x_nchw)           # [B, OH+2, (OW+2)*Cl]

    out_flat = pl.pallas_call(
        _seb_fused_kernel,
        out_shape=jax.ShapeDtypeStruct((B, OH, OW * cout), jnp.float32),
        grid=(B,),
        in_specs=[
            pl.BlockSpec((1, Hh + 2, (Wh + 2) * Ch), lambda i: (i, 0, 0)),
            pl.BlockSpec((1, OH + 2, (OW + 2) * Cl), lambda i: (i, 0, 0)),
            pl.BlockSpec(wh_t.shape, lambda i: (0, 0, 0)),
            pl.BlockSpec(wl_t.shape, lambda i: (0, 0, 0)),
            pl.BlockSpec(A.shape, lambda i: (0, 0)),
            pl.BlockSpec(Bexp.shape, lambda i: (0, 0)),
            pl.BlockSpec(b_tile.shape, lambda i: (0, 0)),
        ],
        out_specs=pl.BlockSpec((1, OH, OW * cout), lambda i: (i, 0, 0)),
        compiler_params=pltpu.CompilerParams(
            dimension_semantics=("parallel",),      # both TCs on v7x when B>1
            vmem_limit_bytes=32 * 1024 * 1024),
    )(hp, lp, wh_t, wl_t, A, Bexp, b_tile)

    out = out_flat.reshape(B, OH, OW, cout)          # free (contiguous)
    return jnp.transpose(out, (0, 3, 1, 2))          # -> NCHW


# ---------------------------------------------------------------------------
# Plain-JAX reference (exact f32) for the sanity check
# ---------------------------------------------------------------------------
def reference(high_x, low_x, params):
    P = lax.Precision.HIGHEST

    def conv(x, w, b, pad):
        y = lax.conv_general_dilated(
            x, w, (1, 1), [(pad, pad), (pad, pad)],
            dimension_numbers=("NCHW", "HWIO", "NCHW"), precision=P)
        return y + b.reshape(1, -1, 1, 1)

    w3, b3 = params["conv3x3"]
    w31, b31 = params["conv3x31"]
    w1, b1 = params["conv1x1"]
    w11, b11 = params["conv1x11"]

    hx = conv(high_x, w3, b3, 1)
    _, _, Hh, Wh = hx.shape
    A = jnp.asarray(bilinear_matrix(Hh, 2 * Hh))
    Bm = jnp.asarray(bilinear_matrix(Wh, 2 * Wh))
    hx = jnp.einsum("oh,pw,bchw->bcop", A, Bm, hx, precision=P)
    hx = conv(hx, w11, b11, 0)
    lx = conv(low_x, w31, b31, 1)
    lx = conv(lx, w1, b1, 0)
    return hx + lx


if __name__ == "__main__":
    B = 2
    high_in, low_in, out_plane = 4, 8, 8     # out_plane must equal low_in_plane
    Hh = Wh = 8                              # high-res feature is 2x smaller
    Hl = Wl = 16

    key = jax.random.PRNGKey(0)
    kp, kh, kl = jax.random.split(key, 3)
    params = init_params(kp, high_in, low_in, out_plane)
    high_x = jax.random.normal(kh, (B, high_in, Hh, Wh), jnp.float32)
    low_x = jax.random.normal(kl, (B, low_in, Hl, Wl), jnp.float32)

    kparams = prepare_kernel_params(params, Hh, Wh, Hl, Wl)

    out = sematic_embed_block(high_x, low_x, kparams)
    out = jax.block_until_ready(out)
    assert out.shape == (B, out_plane, Hl, Wl), out.shape

    ref = jax.block_until_ready(reference(high_x, low_x, params))
    # Kernel uses bf16 MXU operands (f32 accumulation); compare against the
    # exact-f32 reference with a correspondingly loosened tolerance.
    np.testing.assert_allclose(np.asarray(out), np.asarray(ref),
                               rtol=2e-2, atol=2e-2)
    print("KERNEL_OK")
</pallas_src>

<mosaic_0001>
module attributes {stable_mosaic.version = 11 : i64} {
  func.func @_seb_fused_kernel(%arg0: i32, %arg1: memref<1x10x40xbf16, #tpu.memory_space<vmem>>, %arg2: memref<1x18x144xbf16, #tpu.memory_space<vmem>>, %arg3: memref<3x40x64xbf16, #tpu.memory_space<vmem>>, %arg4: memref<3x144x128xbf16, #tpu.memory_space<vmem>>, %arg5: memref<16x8xbf16, #tpu.memory_space<vmem>>, %arg6: memref<64x128xbf16, #tpu.memory_space<vmem>>, %arg7: memref<1x128xf32, #tpu.memory_space<vmem>>, %arg8: memref<1x16x128xf32, #tpu.memory_space<vmem>>) attributes {dimension_semantics = [#tpu.dimension_semantics<parallel>], iteration_bounds = array<i64: 2>, scalar_prefetch = 0 : i64, scratch_operands = 0 : i64, tpu.core_type = #tpu.core_type<tc>, window_params = [{transform_indices = @transform_0, window_bounds = array<i64: 1, 10, 40>}, {transform_indices = @transform_1, window_bounds = array<i64: 1, 18, 144>}, {pipeline_mode = #tpu.pipeline_mode<synchronous>, transform_indices = @transform_2, window_bounds = array<i64: 3, 40, 64>}, {pipeline_mode = #tpu.pipeline_mode<synchronous>, transform_indices = @transform_3, window_bounds = array<i64: 3, 144, 128>}, {pipeline_mode = #tpu.pipeline_mode<synchronous>, transform_indices = @transform_4, window_bounds = array<i64: 16, 8>}, {pipeline_mode = #tpu.pipeline_mode<synchronous>, transform_indices = @transform_5, window_bounds = array<i64: 64, 128>}, {pipeline_mode = #tpu.pipeline_mode<synchronous>, transform_indices = @transform_6, window_bounds = array<i64: 1, 128>}, {transform_indices = @transform_7, window_bounds = array<i64: 1, 16, 128>}]} {
    %c0 = arith.constant 0 : index
    %c0_0 = arith.constant 0 : index
    %c0_1 = arith.constant 0 : index
    %0 = vector.load %arg1[%c0, %c0_0, %c0_1] : memref<1x10x40xbf16, #tpu.memory_space<vmem>>, vector<1x8x40xbf16>
    %1 = vector.shape_cast %0 : vector<1x8x40xbf16> to vector<8x40xbf16>
    %c0_2 = arith.constant 0 : index
    %c0_3 = arith.constant 0 : index
    %c0_4 = arith.constant 0 : index
    %2 = vector.load %arg3[%c0_2, %c0_3, %c0_4] : memref<3x40x64xbf16, #tpu.memory_space<vmem>>, vector<1x40x64xbf16>
    %3 = vector.shape_cast %2 : vector<1x40x64xbf16> to vector<40x64xbf16>
    %cst = arith.constant dense<0.000000e+00> : vector<8x64xf32>
    %4 = tpu.matmul %1, %3, %cst {dimension_numbers = #tpu.dot_dimension_numbers<[1], [0], [0], [1], [0, 0, 1, 1], [], []>} : vector<8x40xbf16>, vector<40x64xbf16>, vector<8x64xf32> -> vector<8x64xf32>
    %c0_5 = arith.constant 0 : index
    %c1 = arith.constant 1 : index
    %c0_6 = arith.constant 0 : index
    %5 = vector.load %arg1[%c0_5, %c1, %c0_6] : memref<1x10x40xbf16, #tpu.memory_space<vmem>>, vector<1x8x40xbf16>
    %6 = vector.shape_cast %5 : vector<1x8x40xbf16> to vector<8x40xbf16>
    %c1_7 = arith.constant 1 : index
    %c0_8 = arith.constant 0 : index
    %c0_9 = arith.constant 0 : index
    %7 = vector.load %arg3[%c1_7, %c0_8, %c0_9] : memref<3x40x64xbf16, #tpu.memory_space<vmem>>, vector<1x40x64xbf16>
    %8 = vector.shape_cast %7 : vector<1x40x64xbf16> to vector<40x64xbf16>
    %cst_10 = arith.constant dense<0.000000e+00> : vector<8x64xf32>
    %9 = tpu.matmul %6, %8, %cst_10 {dimension_numbers = #tpu.dot_dimension_numbers<[1], [0], [0], [1], [0, 0, 1, 1], [], []>} : vector<8x40xbf16>, vector<40x64xbf16>, vector<8x64xf32> -> vector<8x64xf32>
    %10 = arith.addf %4, %9 : vector<8x64xf32>
    %c0_11 = arith.constant 0 : index
    %c2 = arith.constant 2 : index
    %c0_12 = arith.constant 0 : index
    %11 = vector.load %arg1[%c0_11, %c2, %c0_12] : memref<1x10x40xbf16, #tpu.memory_space<vmem>>, vector<1x8x40xbf16>
    %12 = vector.shape_cast %11 : vector<1x8x40xbf16> to vector<8x40xbf16>
    %c2_13 = arith.constant 2 : index
    %c0_14 = arith.constant 0 : index
    %c0_15 = arith.constant 0 : index
    %13 = vector.load %arg3[%c2_13, %c0_14, %c0_15] : memref<3x40x64xbf16, #tpu.memory_space<vmem>>, vector<1x40x64xbf16>
    %14 = vector.shape_cast %13 : vector<1x40x64xbf16> to vector<40x64xbf16>
    %cst_16 = arith.constant dense<0.000000e+00> : vector<8x64xf32>
    %15 = tpu.matmul %12, %14, %cst_16 {dimension_numbers = #tpu.dot_dimension_numbers<[1], [0], [0], [1], [0, 0, 1, 1], [], []>} : vector<8x40xbf16>, vector<40x64xbf16>, vector<8x64xf32> -> vector<8x64xf32>
    %16 = arith.addf %10, %15 : vector<8x64xf32>
    %c0_17 = arith.constant 0 : index
    %c0_18 = arith.constant 0 : index
    %17 = vector.load %arg5[%c0_17, %c0_18] : memref<16x8xbf16, #tpu.memory_space<vmem>>, vector<16x8xbf16>
    %18 = arith.truncf %16 : vector<8x64xf32> to vector<8x64xbf16>
    %cst_19 = arith.constant dense<0.000000e+00> : vector<16x64xf32>
    %19 = tpu.matmul %17, %18, %cst_19 {dimension_numbers = #tpu.dot_dimension_numbers<[1], [0], [0], [1], [0, 0, 1, 1], [], []>} : vector<16x8xbf16>, vector<8x64xbf16>, vector<16x64xf32> -> vector<16x64xf32>
    %20 = arith.truncf %19 : vector<16x64xf32> to vector<16x64xbf16>
    %c0_20 = arith.constant 0 : index
    %c0_21 = arith.constant 0 : index
    %21 = vector.load %arg6[%c0_20, %c0_21] : memref<64x128xbf16, #tpu.memory_space<vmem>>, vector<64x128xbf16>
    %cst_22 = arith.constant dense<0.000000e+00> : vector<16x128xf32>
    %22 = tpu.matmul %20, %21, %cst_22 {dimension_numbers = #tpu.dot_dimension_numbers<[1], [0], [0], [1], [0, 0, 1, 1], [], []>} : vector<16x64xbf16>, vector<64x128xbf16>, vector<16x128xf32> -> vector<16x128xf32>
    %c0_23 = arith.constant 0 : index
    %c0_24 = arith.constant 0 : index
    %23 = vector.load %arg7[%c0_23, %c0_24] : memref<1x128xf32, #tpu.memory_space<vmem>>, vector<1x128xf32>
    %24 = vector.broadcast %23 : vector<1x128xf32> to vector<16x128xf32>
    %25 = arith.addf %22, %24 : vector<16x128xf32>
    %c0_25 = arith.constant 0 : index
    %c0_26 = arith.constant 0 : index
    %c0_27 = arith.constant 0 : index
    %26 = vector.load %arg2[%c0_25, %c0_26, %c0_27] : memref<1x18x144xbf16, #tpu.memory_space<vmem>>, vector<1x16x144xbf16>
    %27 = vector.shape_cast %26 : vector<1x16x144xbf16> to vector<16x144xbf16>
    %c0_28 = arith.constant 0 : index
    %c0_29 = arith.constant 0 : index
    %c0_30 = arith.constant 0 : index
    %28 = vector.load %arg4[%c0_28, %c0_29, %c0_30] : memref<3x144x128xbf16, #tpu.memory_space<vmem>>, vector<1x144x128xbf16>
    %29 = vector.shape_cast %28 : vector<1x144x128xbf16> to vector<144x128xbf16>
    %cst_31 = arith.constant dense<0.000000e+00> : vector<16x128xf32>
    %30 = tpu.matmul %27, %29, %cst_31 {dimension_numbers = #tpu.dot_dimension_numbers<[1], [0], [0], [1], [0, 0, 1, 1], [], []>} : vector<16x144xbf16>, vector<144x128xbf16>, vector<16x128xf32> -> vector<16x128xf32>
    %31 = arith.addf %25, %30 : vector<16x128xf32>
    %c0_32 = arith.constant 0 : index
    %c1_33 = arith.constant 1 : index
    %c0_34 = arith.constant 0 : index
    %32 = vector.load %arg2[%c0_32, %c1_33, %c0_34] : memref<1x18x144xbf16, #tpu.memory_space<vmem>>, vector<1x16x144xbf16>
    %33 = vector.shape_cast %32 : vector<1x16x144xbf16> to vector<16x144xbf16>
    %c1_35 = arith.constant 1 : index
    %c0_36 = arith.constant 0 : index
    %c0_37 = arith.constant 0 : index
    %34 = vector.load %arg4[%c1_35, %c0_36, %c0_37] : memref<3x144x128xbf16, #tpu.memory_space<vmem>>, vector<1x144x128xbf16>
    %35 = vector.shape_cast %34 : vector<1x144x128xbf16> to vector<144x128xbf16>
    %cst_38 = arith.constant dense<0.000000e+00> : vector<16x128xf32>
    %36 = tpu.matmul %33, %35, %cst_38 {dimension_numbers = #tpu.dot_dimension_numbers<[1], [0], [0], [1], [0, 0, 1, 1], [], []>} : vector<16x144xbf16>, vector<144x128xbf16>, vector<16x128xf32> -> vector<16x128xf32>
    %37 = arith.addf %31, %36 : vector<16x128xf32>
    %c0_39 = arith.constant 0 : index
    %c2_40 = arith.constant 2 : index
    %c0_41 = arith.constant 0 : index
    %38 = vector.load %arg2[%c0_39, %c2_40, %c0_41] : memref<1x18x144xbf16, #tpu.memory_space<vmem>>, vector<1x16x144xbf16>
    %39 = vector.shape_cast %38 : vector<1x16x144xbf16> to vector<16x144xbf16>
    %c2_42 = arith.constant 2 : index
    %c0_43 = arith.constant 0 : index
    %c0_44 = arith.constant 0 : index
    %40 = vector.load %arg4[%c2_42, %c0_43, %c0_44] : memref<3x144x128xbf16, #tpu.memory_space<vmem>>, vector<1x144x128xbf16>
    %41 = vector.shape_cast %40 : vector<1x144x128xbf16> to vector<144x128xbf16>
    %cst_45 = arith.constant dense<0.000000e+00> : vector<16x128xf32>
    %42 = tpu.matmul %39, %41, %cst_45 {dimension_numbers = #tpu.dot_dimension_numbers<[1], [0], [0], [1], [0, 0, 1, 1], [], []>} : vector<16x144xbf16>, vector<144x128xbf16>, vector<16x128xf32> -> vector<16x128xf32>
    %43 = arith.addf %37, %42 : vector<16x128xf32>
    %c0_46 = arith.constant 0 : index
    %c0_47 = arith.constant 0 : index
    %c0_48 = arith.constant 0 : index
    %44 = vector.load %arg8[%c0_46, %c0_47, %c0_48] : memref<1x16x128xf32, #tpu.memory_space<vmem>>, vector<1x16x128xf32>
    %45 = vector.shape_cast %44 : vector<1x16x128xf32> to vector<16x128xf32>
    %46 = vector.shape_cast %43 : vector<16x128xf32> to vector<1x16x128xf32>
    tpu.vector_store %arg8[%c0_46, %c0_47, %c0_48], %46 {strides = array<i32>} : memref<1x16x128xf32, #tpu.memory_space<vmem>>, vector<1x16x128xf32>,
    return
  }
  func.func @transform_0(%arg0: i32) -> (i32, i32, i32) {
    %c0_i32 = arith.constant 0 : i32
    %c0_i32_0 = arith.constant 0 : i32
    %c0_i32_1 = arith.constant 0 : i32
    return %arg0, %c0_i32, %c0_i32_0 : i32, i32, i32
  }
  func.func @transform_1(%arg0: i32) -> (i32, i32, i32) {
    %c0_i32 = arith.constant 0 : i32
    %c0_i32_0 = arith.constant 0 : i32
    %c0_i32_1 = arith.constant 0 : i32
    return %arg0, %c0_i32, %c0_i32_0 : i32, i32, i32
  }
  func.func @transform_2(%arg0: i32) -> (i32, i32, i32) {
    %c0_i32 = arith.constant 0 : i32
    %c0_i32_0 = arith.constant 0 : i32
    %c0_i32_1 = arith.constant 0 : i32
    %c0_i32_2 = arith.constant 0 : i32
    return %c0_i32, %c0_i32_0, %c0_i32_1 : i32, i32, i32
  }
  func.func @transform_3(%arg0: i32) -> (i32, i32, i32) {
    %c0_i32 = arith.constant 0 : i32
    %c0_i32_0 = arith.constant 0 : i32
    %c0_i32_1 = arith.constant 0 : i32
    %c0_i32_2 = arith.constant 0 : i32
    return %c0_i32, %c0_i32_0, %c0_i32_1 : i32, i32, i32
  }
  func.func @transform_4(%arg0: i32) -> (i32, i32) {
    %c0_i32 = arith.constant 0 : i32
    %c0_i32_0 = arith.constant 0 : i32
    %c0_i32_1 = arith.constant 0 : i32
    return %c0_i32, %c0_i32_0 : i32, i32
  }
  func.func @transform_5(%arg0: i32) -> (i32, i32) {
    %c0_i32 = arith.constant 0 : i32
    %c0_i32_0 = arith.constant 0 : i32
    %c0_i32_1 = arith.constant 0 : i32
    return %c0_i32, %c0_i32_0 : i32, i32
  }
  func.func @transform_6(%arg0: i32) -> (i32, i32) {
    %c0_i32 = arith.constant 0 : i32
    %c0_i32_0 = arith.constant 0 : i32
    %c0_i32_1 = arith.constant 0 : i32
    return %c0_i32, %c0_i32_0 : i32, i32
  }
  func.func @transform_7(%arg0: i32) -> (i32, i32, i32) {
    %c0_i32 = arith.constant 0 : i32
    %c0_i32_0 = arith.constant 0 : i32
    %c0_i32_1 = arith.constant 0 : i32
    return %arg0, %c0_i32, %c0_i32_0 : i32, i32, i32
  }
}

</mosaic_0001>

<llo_original>
// kernel: tpu_custom_call.1
$region0: #{tpu_custom_call.1}
  #allocation0 [shape = 'u32[]', space=smem, size = 0x4, offset = 0x4, fixed_abs, tag = 'smem constant byte address 0x4 - core index']
  #allocation1 [shape = 'u32[72,128]{1,0:T(1,128)}', space=vmem, size = 0x9000, scoped, tag = 'internal scratch']
  %s0 = inlined_call_operand.vmem [shape: bf16[2,10,40], index: 0, kind: input, shape index: {}]
  %s1 = inlined_call_operand.vmem [shape: bf16[2,18,144], index: 1, kind: input, shape index: {}]
  %s2 = inlined_call_operand.vmem [shape: bf16[3,40,64], index: 2, kind: input, shape index: {}]
  %s3 = inlined_call_operand.hbm [shape: bf16[3,144,128], index: 3, kind: input, shape index: {}]
  %s4 = inlined_call_operand.vmem [shape: bf16[16,8], index: 4, kind: input, shape index: {}]
  %s5 = inlined_call_operand.hbm [shape: bf16[64,128], index: 5, kind: input, shape index: {}]
  %s6 = inlined_call_operand.vmem [shape: f32[1,128], index: 6, kind: input, shape index: {}]
  %s7 = inlined_call_operand.hbm [shape: f32[2,16,128], index: 7, kind: output, shape index: {}]
  %s8 = sld [smem:[#allocation0]]
  $region69: #{tpu_custom_call.1} parent=0
    _
  %s10 = ssub.s32 1, %s8
  %s11 = scalar_select 0, %s10, %s8
  $region1: #{tpu_custom_call.1} parent=0
    #allocation2 [shape = 'u8[110592]{0}', space=vmem, size = 0x1b000, scoped, tag = 'input window, operand 3, single buffered']
    #allocation3 [shape = 's32[2]{0}', space=sflag, size = 0x8, scoped, tag = 'scoped memory for tpu_custom_call.1']
    #allocation4 [shape = 's32[2]{0}', space=sflag, size = 0x8, scoped, tag = 'scoped memory for tpu_custom_call.1']
    #allocation5 [shape = 'u8[16384]{0}', space=vmem, size = 0x4000, scoped, tag = 'input window, operand 5, single buffered']
    #allocation6 [shape = 's32[1]{0}', space=sflag, size = 0x4, scoped, tag = 'scoped memory for tpu_custom_call.1']
    #allocation7 [shape = 'u8[16384]{0}', space=vmem, size = 0x4000, scoped, tag = 'output window, operand 0']
    %12 = vsyncpa [#allocation3], 0
    %13 = vsyncpa [#allocation6], 0
    %14 = vsyncpa [#allocation4], 0
    %s15 = scalar_lea.sflag [#allocation4], 1
    %16 = vsyncpa %s15, 0
    loop: start=0, step=1, limit=4
    $region2: #{tpu_custom_call.1} parent=1 // loop_pre_header
      _
    $region3: #{tpu_custom_call.1} parent=1 // loop_header
      %s18 = sphi 0, %s22
      %p19 = scmp.ge.s32.totalorder %s18, 4
      %s28 = sphi 0, %s30
      %s31 = sphi 0, %s28
      %s32 = sphi 0, %s31
      %s48 = sphi 0, %s32
      %s54 = sphi 0, %s56
      %s57 = sphi 0, %s54
      %s58 = sphi 0, %s57
      %s74 = sphi 0, %s58
      %s78 = sphi 0, %s78
      %s80 = sphi 0, %s78
      %s81 = sphi 0, %s80
      %s95 = sphi 0, %s81
      %s99 = sphi 0, %s99
      %s101 = sphi 0, %s99
      %s102 = sphi 0, %s101
      %s116 = sphi 0, %s102
      %s120 = sphi 0, %s120
      %s122 = sphi 0, %s120
      %s123 = sphi 0, %s122
      %s137 = sphi 0, %s123
      %s141 = sphi 0, %s141
      %s143 = sphi 0, %s141
      %s144 = sphi 0, %s143
      %s158 = sphi 0, %s144
      %s162 = sphi 0, %s162
      %s164 = sphi 0, %s162
      %s165 = sphi 0, %s164
      %s179 = sphi 0, %s165
      %s185 = sphi 0, %s187
      %s188 = sphi 0, %s185
      %s189 = sphi 0, %s188
      %s205 = sphi 0, %s189
    $region4: #{tpu_custom_call.1} parent=1 // loop_header_branch
      %21 = sbr.rel (%p19) target = $region8
    $region5: #{tpu_custom_call.1} parent=1 // loop_body
      %s23 = ssub.s32 %s18, 1
      %s24 = ssub.s32 %s18, 2
      %s25 = sadd.s32 %s18, 1
      %s26 = ssub.s32 %s18, %s25
      %p27 = scmp.eq.s32.totalorder %s26, 0
      %s29 = sadd.s32 %s28, 1
      %s30 = scalar_select %p27, %s28, %s29
      %p33 = pneg %p27
      %p34 = scmp.eq.s32.totalorder %s18, 1
      %p35 = por %p33, %p34
      %p36 = scmp.ne.s32.totalorder %s28, %s31
      %p37 = scmp.eq.s32.totalorder %s18, 0
      %p38 = por %p36, %p37
      %p39 = scmp.ne.s32.totalorder %s28, %s31
      %p40 = scmp.eq.s32.totalorder %s23, 1
      %p41 = por %p39, %p40
      %p42 = scmp.ne.s32.totalorder %s31, %s32
      %p43 = scmp.eq.s32.totalorder %s23, 0
      %p44 = por %p42, %p43
      %p45 = scmp.ne.s32.totalorder %s31, %s32
      %p46 = scmp.eq.s32.totalorder %s24, 1
      %p47 = por %p45, %p46
      %p49 = scmp.ne.s32.totalorder %s32, %s48
      %p50 = scmp.eq.s32.totalorder %s24, 0
      %p51 = por %p49, %p50
      %s52 = ssub.s32 %s18, %s25
      %p53 = scmp.eq.s32.totalorder %s52, 0
      %s55 = sadd.s32 %s54, 1
      %s56 = scalar_select %p53, %s54, %s55
      %p59 = pneg %p53
      %p60 = scmp.eq.s32.totalorder %s18, 1
      %p61 = por %p59, %p60
      %p62 = scmp.ne.s32.totalorder %s54, %s57
      %p63 = scmp.eq.s32.totalorder %s18, 0
      %p64 = por %p62, %p63
      %p65 = scmp.ne.s32.totalorder %s54, %s57
      %p66 = scmp.eq.s32.totalorder %s23, 1
      %p67 = por %p65, %p66
      %p68 = scmp.ne.s32.totalorder %s57, %s58
      %p69 = scmp.eq.s32.totalorder %s23, 0
      %p70 = por %p68, %p69
      %p71 = scmp.ne.s32.totalorder %s57, %s58
      %p72 = scmp.eq.s32.totalorder %s24, 1
      %p73 = por %p71, %p72
      %p75 = scmp.ne.s32.totalorder %s58, %s74
      %p76 = scmp.eq.s32.totalorder %s24, 0
      %p77 = por %p75, %p76
      %s79 = sadd.s32 %s78, 1
      %p82 = scmp.eq.s32.totalorder %s18, 1
      %p83 = scmp.ne.s32.totalorder %s78, %s80
      %p84 = scmp.eq.s32.totalorder %s18, 0
      %p85 = por %p83, %p84
      %p86 = scmp.ne.s32.totalorder %s78, %s80
      %p87 = scmp.eq.s32.totalorder %s23, 1
      %p88 = por %p86, %p87
      %p89 = scmp.ne.s32.totalorder %s80, %s81
      %p90 = scmp.eq.s32.totalorder %s23, 0
      %p91 = por %p89, %p90
      %p92 = scmp.ne.s32.totalorder %s80, %s81
      %p93 = scmp.eq.s32.totalorder %s24, 1
      %p94 = por %p92, %p93
      %p96 = scmp.ne.s32.totalorder %s81, %s95
      %p97 = scmp.eq.s32.totalorder %s24, 0
      %p98 = por %p96, %p97
      %s100 = sadd.s32 %s99, 1
      %p103 = scmp.eq.s32.totalorder %s18, 1
      %p104 = scmp.ne.s32.totalorder %s99, %s101
      %p105 = scmp.eq.s32.totalorder %s18, 0
      %p106 = por %p104, %p105
      %p107 = scmp.ne.s32.totalorder %s99, %s101
      %p108 = scmp.eq.s32.totalorder %s23, 1
      %p109 = por %p107, %p108
      %p110 = scmp.ne.s32.totalorder %s101, %s102
      %p111 = scmp.eq.s32.totalorder %s23, 0
      %p112 = por %p110, %p111
      %p113 = scmp.ne.s32.totalorder %s101, %s102
      %p114 = scmp.eq.s32.totalorder %s24, 1
      %p115 = por %p113, %p114
      %p117 = scmp.ne.s32.totalorder %s102, %s116
      %p118 = scmp.eq.s32.totalorder %s24, 0
      %p119 = por %p117, %p118
      %s121 = sadd.s32 %s120, 1
      %p124 = scmp.eq.s32.totalorder %s18, 1
      %p125 = scmp.ne.s32.totalorder %s120, %s122
      %p126 = scmp.eq.s32.totalorder %s18, 0
      %p127 = por %p125, %p126
      %p128 = scmp.ne.s32.totalorder %s120, %s122
      %p129 = scmp.eq.s32.totalorder %s23, 1
      %p130 = por %p128, %p129
      %p131 = scmp.ne.s32.totalorder %s122, %s123
      %p132 = scmp.eq.s32.totalorder %s23, 0
      %p133 = por %p131, %p132
      %p134 = scmp.ne.s32.totalorder %s122, %s123
      %p135 = scmp.eq.s32.totalorder %s24, 1
      %p136 = por %p134, %p135
      %p138 = scmp.ne.s32.totalorder %s123, %s137
      %p139 = scmp.eq.s32.totalorder %s24, 0
      %p140 = por %p138, %p139
      %s142 = sadd.s32 %s141, 1
      %p145 = scmp.eq.s32.totalorder %s18, 1
      %p146 = scmp.ne.s32.totalorder %s141, %s143
      %p147 = scmp.eq.s32.totalorder %s18, 0
      %p148 = por %p146, %p147
      %p149 = scmp.ne.s32.totalorder %s141, %s143
      %p150 = scmp.eq.s32.totalorder %s23, 1
      %p151 = por %p149, %p150
      %p152 = scmp.ne.s32.totalorder %s143, %s144
      %p153 = scmp.eq.s32.totalorder %s23, 0
      %p154 = por %p152, %p153
      %p155 = scmp.ne.s32.totalorder %s143, %s144
      %p156 = scmp.eq.s32.totalorder %s24, 1
      %p157 = por %p155, %p156
      %p159 = scmp.ne.s32.totalorder %s144, %s158
      %p160 = scmp.eq.s32.totalorder %s24, 0
      %p161 = por %p159, %p160
      %s163 = sadd.s32 %s162, 1
      %p166 = scmp.eq.s32.totalorder %s18, 1
      %p167 = scmp.ne.s32.totalorder %s162, %s164
      %p168 = scmp.eq.s32.totalorder %s18, 0
      %p169 = por %p167, %p168
      %p170 = scmp.ne.s32.totalorder %s162, %s164
      %p171 = scmp.eq.s32.totalorder %s23, 1
      %p172 = por %p170, %p171
      %p173 = scmp.ne.s32.totalorder %s164, %s165
      %p174 = scmp.eq.s32.totalorder %s23, 0
      %p175 = por %p173, %p174
      %p176 = scmp.ne.s32.totalorder %s164, %s165
      %p177 = scmp.eq.s32.totalorder %s24, 1
      %p178 = por %p176, %p177
      %p180 = scmp.ne.s32.totalorder %s165, %s179
      %p181 = scmp.eq.s32.totalorder %s24, 0
      %p182 = por %p180, %p181
      %s183 = ssub.s32 %s18, %s25
      %p184 = scmp.eq.s32.totalorder %s183, 0
      %s186 = sadd.s32 %s185, 1
      %s187 = scalar_select %p184, %s185, %s186
      %p190 = pneg %p184
      %p191 = scmp.eq.s32.totalorder %s18, 1
      %p192 = por %p190, %p191
      %p193 = scmp.ne.s32.totalorder %s185, %s188
      %p194 = scmp.eq.s32.totalorder %s18, 0
      %p195 = por %p193, %p194
      %p196 = scmp.ne.s32.totalorder %s185, %s188
      %p197 = scmp.eq.s32.totalorder %s23, 1
      %p198 = por %p196, %p197
      %p199 = scmp.ne.s32.totalorder %s188, %s189
      %p200 = scmp.eq.s32.totalorder %s23, 0
      %p201 = por %p199, %p200
      %p202 = scmp.ne.s32.totalorder %s188, %s189
      %p203 = scmp.eq.s32.totalorder %s24, 1
      %p204 = por %p202, %p203
      %p206 = scmp.ne.s32.totalorder %s189, %s205
      %p207 = scmp.eq.s32.totalorder %s24, 0
      %p208 = por %p206, %p207
      %p209 = scmp.le.s32.totalorder 1, %s18
      %p210 = scmp.lt.s32.totalorder %s18, 3
      %p211 = pnand %p209, %p210
      %p212 = pneg %p211
      // Predicated region
      $region9: #{tpu_custom_call.1} parent=5 // pred_check
        _
      $region10: #{tpu_custom_call.1} parent=5 // pred_check_branch
        %214 = sbr.rel (%p211) target = $region12
      $region11: #{tpu_custom_call.1} parent=5 // pred_region
        %s215 = ssub.s32 %s18, 1
        // Predicated region
        $region13: #{tpu_custom_call.1} parent=11 // pred_check
          %p216 = pneg %p91
        $region14: #{tpu_custom_call.1} parent=11 // pred_check_branch
          %218 = sbr.rel (%p216) target = $region16
        $region15: #{tpu_custom_call.1} parent=11 // pred_region
          _
        $region16: #{tpu_custom_call.1} parent=11 // pred_fallthru
          _
        // Predicated region
        $region17: #{tpu_custom_call.1} parent=11 // pred_check
          %p219 = pneg %p112
        $region18: #{tpu_custom_call.1} parent=11 // pred_check_branch
          %221 = sbr.rel (%p219) target = $region20
        $region19: #{tpu_custom_call.1} parent=11 // pred_region
          %223 = vsyncadd [#allocation3], 0
          %s224 = sshll.u32 %s3, 4
          %s225 = int_to_ptr.hbm [resolvable:$true] %s224
          %s226 = sshll.u32 [#allocation2], 4
          %s227 = int_to_ptr.vmem [resolvable:$true] %s226
          %232 = dma.hbm_to_vmem [thread:$0]  %s225, 3456, %s227, [#allocation3], 64, 64, 4
        $region20: #{tpu_custom_call.1} parent=11 // pred_fallthru
          _
        // Predicated region
        $region21: #{tpu_custom_call.1} parent=11 // pred_check
          %p233 = pneg %p133
        $region22: #{tpu_custom_call.1} parent=11 // pred_check_branch
          %235 = sbr.rel (%p233) target = $region24
        $region23: #{tpu_custom_call.1} parent=11 // pred_region
          _
        $region24: #{tpu_custom_call.1} parent=11 // pred_fallthru
          _
        // Predicated region
        $region25: #{tpu_custom_call.1} parent=11 // pred_check
          %p236 = pneg %p154
        $region26: #{tpu_custom_call.1} parent=11 // pred_check_branch
          %238 = sbr.rel (%p236) target = $region28
        $region27: #{tpu_custom_call.1} parent=11 // pred_region
          %240 = vsyncadd [#allocation6], 0
          %s241 = sshll.u32 %s5, 4
          %s242 = int_to_ptr.hbm [resolvable:$true] %s241
          %s243 = sshll.u32 [#allocation5], 4
          %s244 = int_to_ptr.vmem [resolvable:$true] %s243
          %249 = dma.hbm_to_vmem [thread:$0]  %s242, 512, %s244, [#allocation6], 64, 64, 4
        $region28: #{tpu_custom_call.1} parent=11 // pred_fallthru
          _
        // Predicated region
        $region29: #{tpu_custom_call.1} parent=11 // pred_check
          %p250 = pneg %p175
        $region30: #{tpu_custom_call.1} parent=11 // pred_check_branch
          %252 = sbr.rel (%p250) target = $region32
        $region31: #{tpu_custom_call.1} parent=11 // pred_region
          _
        $region32: #{tpu_custom_call.1} parent=11 // pred_fallthru
          _
      $region12: #{tpu_custom_call.1} parent=5 // pred_fallthru
        _
      %p253 = scmp.lt.s32.totalorder %s18, 2
      // Predicated region
      $region33: #{tpu_custom_call.1} parent=5 // pred_check
        %p254 = pneg %p253
      $region34: #{tpu_custom_call.1} parent=5 // pred_check_branch
        %256 = sbr.rel (%p254) target = $region36
      $region35: #{tpu_custom_call.1} parent=5 // pred_region
        // Predicated region
        $region37: #{tpu_custom_call.1} parent=35 // pred_check
          %p257 = pneg %p38
        $region38: #{tpu_custom_call.1} parent=35 // pred_check_branch
          %259 = sbr.rel (%p257) target = $region40
        $region39: #{tpu_custom_call.1} parent=35 // pred_region
          %p260 = scmp.lt.s32.totalorder %s18, 1
          %s261 = scalar_select %p260, %s18, 1
          %s262 = smul.addr %s261, 2
          %s263 = smul.addr %s262, 4
          %s264 = scalar_lea.vmem %s0, %s263
        $region40: #{tpu_custom_call.1} parent=35 // pred_fallthru
          _
        // Predicated region
        $region41: #{tpu_custom_call.1} parent=35 // pred_check
          %p265 = pneg %p64
        $region42: #{tpu_custom_call.1} parent=35 // pred_check_branch
          %267 = sbr.rel (%p265) target = $region44
        $region43: #{tpu_custom_call.1} parent=35 // pred_region
          %p268 = scmp.lt.s32.totalorder %s18, 1
          %s269 = scalar_select %p268, %s18, 1
          %s270 = smul.addr %s269, 6
          %s271 = smul.addr %s270, 4
          %s272 = scalar_lea.vmem %s1, %s271
        $region44: #{tpu_custom_call.1} parent=35 // pred_fallthru
          _
      $region36: #{tpu_custom_call.1} parent=5 // pred_fallthru
        _
      %p273 = scmp.le.s32.totalorder 1, %s18
      %p274 = scmp.lt.s32.totalorder %s18, 3
      %p275 = pnand %p273, %p274
      %p276 = pneg %p275
      // Predicated region
      $region45: #{tpu_custom_call.1} parent=5 // pred_check
        _
      $region46: #{tpu_custom_call.1} parent=5 // pred_check_branch
        %278 = sbr.rel (%p275) target = $region48
      $region47: #{tpu_custom_call.1} parent=5 // pred_region
        %s279 = ssub.s32 %s18, 1
        // Predicated region
        $region49: #{tpu_custom_call.1} parent=47 // pred_check
          %p280 = pneg %p112
        $region50: #{tpu_custom_call.1} parent=47 // pred_check_branch
          %282 = sbr.rel (%p280) target = $region52
        $region51: #{tpu_custom_call.1} parent=47 // pred_region
          %284 = dma.done [#allocation3], 3456
        $region52: #{tpu_custom_call.1} parent=47 // pred_fallthru
          _
        // Predicated region
        $region53: #{tpu_custom_call.1} parent=47 // pred_check
          %p285 = pneg %p154
        $region54: #{tpu_custom_call.1} parent=47 // pred_check_branch
          %287 = sbr.rel (%p285) target = $region56
        $region55: #{tpu_custom_call.1} parent=47 // pred_region
          %289 = dma.done [#allocation6], 512
        $region56: #{tpu_custom_call.1} parent=47 // pred_fallthru
          _
        %p290 = scmp.lt.s32.totalorder %s23, 1
        %s291 = scalar_select %p290, %s23, 1
        %s292 = smul.addr %s291, 2
        %s293 = smul.addr %s292, 4
        %s294 = scalar_lea.vmem %s0, %s293
        %p295 = pneg %p44
        %p296 = pneg %p41
        %p297 = scmp.lt.s32.totalorder %s23, 1
        %s298 = scalar_select %p297, %s23, 1
        %s299 = smul.addr %s298, 6
        %s300 = smul.addr %s299, 4
        %s301 = scalar_lea.vmem %s1, %s300
        %p302 = pneg %p70
        %p303 = pneg %p67
        %p304 = pneg %p91
        %p305 = pneg %p88
        %p306 = pneg %p112
        %p307 = pneg %p109
        %p308 = pneg %p133
        %p309 = pneg %p130
        %p310 = pneg %p154
        %p311 = pneg %p151
        %p312 = pneg %p175
        %p313 = pneg %p172
        %p314 = pneg %p201
        %p315 = pneg %p198
        %s316 = sand.u32 %s188, 1
        %s317 = scalar_lea.sflag [#allocation4], %s316
        %s318 = sand.u32 %s188, 1
        %s319 = smul.addr %s318, 16
        %s320 = scalar_lea.vmem [#allocation7], %s319
        %p321 = scmp.lt.s32.totalorder %s23, 1
        %s322 = scalar_select %p321, %s23, 1
        %s323 = smul.addr %s322, 2
        %s324 = smul.addr %s323, 4
        %s325 = scalar_lea.vmem %s0, %s324
        %p326 = scmp.lt.s32.totalorder %s23, 1
        %s327 = scalar_select %p326, %s23, 1
        %s328 = smul.addr %s327, 6
        %s329 = smul.addr %s328, 4
        %s330 = scalar_lea.vmem %s1, %s329
        %v332 = vld [vmem:[%s325] sm:$0xf]
        %v333 = vld [vmem:[%s2] sm:$0xf]
        %v334 = vld [vmem:[%s2 + $0x4] sm:$0xf]
        %v335 = vld [vmem:[%s2 + $0x8] sm:$0xf]
        %v336 = vld [vmem:[%s2 + $0xc] sm:$0xf]
        %v337 = vld [vmem:[%s2 + $0x10] sm:$0xf]
        %v338 = vld [vmem:[%s325 + $0x4] sm:$0x1]
        %s339 = scalar_lea.vmem %s2, 20
        %v340 = vld [vmem:[%s339] sm:$0xf]
        %v341 = vld [vmem:[%s339 + $0x4] sm:$0xf]
        %v342 = vld [vmem:[%s339 + $0x8] sm:$0xf]
        %v343 = vld [vmem:[%s339 + $0xc] sm:$0xf]
        %v344 = vld [vmem:[%s339 + $0x10] sm:$0xf]
        %v347 = vunpack.c.l.b16 %v332
        %v348 = vunpack.c.l.b16 %v338
        %v349 = vpack.c.b16 %v348, %v347
        %v351 = vshrl.u32 %v349, 16
        %v353 = vshll.u32 %v349, 16
        %v355 = vrot.slane %v353, 1
        %v356 = vor.u32 %v351, %v355
        %v362 = vunpack.c.l.b16 %v340
        %v363 = vunpack.c.l.b16 %v341
        %v364 = vunpack.c.l.b16 %v342
        %v365 = vunpack.c.l.b16 %v343
        %v366 = vunpack.c.l.b16 %v344
        %v367 = vpack.c.b16 %v363, %v362
        %v368 = vpack.c.b16 %v365, %v364
        %v369 = vpack.c.b16 %v366, %v366
        %vm372 = vcmask 326656
        %v374 = vsel %vm372, %v356, 0
        %vm376 = vcmask 1043456
        %v378 = vsel %vm376, %v369, 0
        %380 = vmatpush.bf16.msra.mxu0 0
        %381 = vmatpush.bf16.msra.mxu0 0
        %382 = vmatpush.bf16.msra.mxu0 0
        %383 = vmatpush.bf16.msra.mxu0 0
        %384 = vmatpush.bf16.msra.mxu0 0
        %385 = vmatpush.bf16.msra.mxu0 %v378
        %386 = vmatpush.bf16.msra.mxu0 %v368
        %387 = vmatpush.bf16.msra.mxu0 %v367
        %388 = vmatmul.bf16.gmra.mxu0 %v374
        %v389 = vpop.f32.mrf.mxu0
        %v390 = vadd.f32 0.0, %v389
        %v391 = vpop.f32.mrf.mxu0
        %392 = vdwg.mxu0
        %v398 = vunpack.c.l.b16 %v333
        %v399 = vunpack.c.l.b16 %v334
        %v400 = vunpack.c.l.b16 %v335
        %v401 = vunpack.c.l.b16 %v336
        %v402 = vunpack.c.l.b16 %v337
        %v403 = vpack.c.b16 %v399, %v398
        %v404 = vpack.c.b16 %v401, %v400
        %v405 = vpack.c.b16 %v402, %v402
        %v409 = vsel %vm372, %v332, 0
        %v412 = vsel %vm376, %v405, 0
        %414 = vmatpush.bf16.msra.mxu0 0
        %415 = vmatpush.bf16.msra.mxu0 0
        %416 = vmatpush.bf16.msra.mxu0 0
        %417 = vmatpush.bf16.msra.mxu0 0
        %418 = vmatpush.bf16.msra.mxu0 0
        %419 = vmatpush.bf16.msra.mxu0 %v412
        %420 = vmatpush.bf16.msra.mxu0 %v404
        %421 = vmatpush.bf16.msra.mxu0 %v403
        %422 = vmatmul.bf16.gmra.mxu0 %v409
        %v423 = vpop.f32.mrf.mxu0
        %v424 = vadd.f32 %v390, %v423
        %v425 = vpop.f32.mrf.mxu0
        %426 = vdwg.mxu0
        %v427 = vld [vmem:[%s325] sm:$0xe]
        %s428 = scalar_lea.vmem %s2, 40
        %v429 = vld [vmem:[%s428] sm:$0xf]
        %v430 = vld [vmem:[%s428 + $0x4] sm:$0xf]
        %v431 = vld [vmem:[%s428 + $0x8] sm:$0xf]
        %v432 = vld [vmem:[%s428 + $0xc] sm:$0xf]
        %v433 = vld [vmem:[%s428 + $0x10] sm:$0xf]
        %v435 = vunpack.c.l.b16 %v427
        %v436 = vpack.c.b16 %v348, %v435
        %v437 = vrot.slane %v436, 1
        %v443 = vunpack.c.l.b16 %v429
        %v444 = vunpack.c.l.b16 %v430
        %v445 = vunpack.c.l.b16 %v431
        %v446 = vunpack.c.l.b16 %v432
        %v447 = vunpack.c.l.b16 %v433
        %v448 = vpack.c.b16 %v444, %v443
        %v449 = vpack.c.b16 %v446, %v445
        %v450 = vpack.c.b16 %v447, %v447
        %v454 = vsel %vm372, %v437, 0
        %v457 = vsel %vm376, %v450, 0
        %459 = vmatpush.bf16.msra.mxu0 0
        %460 = vmatpush.bf16.msra.mxu0 0
        %461 = vmatpush.bf16.msra.mxu0 0
        %462 = vmatpush.bf16.msra.mxu0 0
        %463 = vmatpush.bf16.msra.mxu0 0
        %464 = vmatpush.bf16.msra.mxu0 %v457
        %465 = vmatpush.bf16.msra.mxu0 %v449
        %466 = vmatpush.bf16.msra.mxu0 %v448
        %467 = vmatmul.bf16.gmra.mxu0 %v454
        %v468 = vpop.f32.mrf.mxu0
        %v469 = vadd.f32 0.0, %v468
        %v470 = vpop.f32.mrf.mxu0
        %471 = vdwg.mxu0
        %v472 = vadd.f32 %v424, %v469
        %v473 = vld [vmem:[%s4] sm:$0xf]
        %v474 = vld [vmem:[%s4 + $0x4] sm:$0xf]
        %v475 = vpack.c.bf16 %v472, %v472
        %v478 = vunpack.c.l.b16 %v473
        %v479 = vunpack.c.l.b16 %v474
        %v480 = vpack.c.b16 %v479, %v478
        %vm481 = vcmask 64512
        %v483 = vsel %vm481, %v480, 0
        %v486 = vsel %vm376, %v475, 0
        %488 = vmatpush.bf16.msra.mxu0 0
        %489 = vmatpush.bf16.msra.mxu0 0
        %490 = vmatpush.bf16.msra.mxu0 0
        %491 = vmatpush.bf16.msra.mxu0 0
        %492 = vmatpush.bf16.msra.mxu0 0
        %493 = vmatpush.bf16.msra.mxu0 0
        %494 = vmatpush.bf16.msra.mxu0 0
        %495 = vmatpush.bf16.msra.mxu0 %v486
        %496 = vmatmul.bf16.gmra.mxu0 %v483
        %v497 = vpop.f32.mrf.mxu0
        %v498 = vadd.f32 0.0, %v497
        %v499 = vpop.f32.mrf.mxu0
        %v500 = vadd.f32 0.0, %v499
        %501 = vdwg.mxu0
        %v502 = vpack.c.bf16 %v500, %v498
        %v503 = vld [vmem:[#allocation5] sm:$0xf]
        %v504 = vld [vmem:[#allocation5 + $0x4] sm:$0xf]
        %v505 = vld [vmem:[#allocation5 + $0x8] sm:$0xf]
        %v506 = vld [vmem:[#allocation5 + $0xc] sm:$0xf]
        %v507 = vld [vmem:[#allocation5 + $0x10] sm:$0xf]
        %v508 = vld [vmem:[#allocation5 + $0x14] sm:$0xf]
        %v509 = vld [vmem:[#allocation5 + $0x18] sm:$0xf]
        %v510 = vld [vmem:[#allocation5 + $0x1c] sm:$0xf]
        %v511 = vld [vmem:[%s6] sm:$0x1]
        %v513 = vperm.slane %v511, 0
        %v523 = vunpack.c.l.b16 %v503
        %v524 = vunpack.c.l.b16 %v504
        %v525 = vunpack.c.l.b16 %v505
        %v526 = vunpack.c.l.b16 %v506
        %v527 = vunpack.c.l.b16 %v507
        %v528 = vunpack.c.l.b16 %v508
        %v529 = vunpack.c.l.b16 %v509
        %v530 = vunpack.c.l.b16 %v510
        %v531 = vpack.c.b16 %v524, %v523
        %v532 = vpack.c.b16 %v526, %v525
        %v533 = vpack.c.b16 %v528, %v527
        %v534 = vpack.c.b16 %v530, %v529
        %vm539 = vcmask 523264
        %v541 = vsel %vm539, %v502, 0
        %543 = vmatpush.bf16.msra.mxu0 0
        %544 = vmatpush.bf16.msra.mxu0 0
        %545 = vmatpush.bf16.msra.mxu0 0
        %546 = vmatpush.bf16.msra.mxu0 0
        %547 = vmatpush.bf16.msra.mxu0 %v534
        %548 = vmatpush.bf16.msra.mxu0 %v533
        %549 = vmatpush.bf16.msra.mxu0 %v532
        %550 = vmatpush.bf16.msra.mxu0 %v531
        %551 = vmatmul.bf16.gmra.mxu0 %v541
        %v552 = vpop.f32.mrf.mxu0
        %v553 = vadd.f32 %v513, %v552
        %v554 = vpop.f32.mrf.mxu0
        %v555 = vadd.f32 %v513, %v554
        %556 = vdwg.mxu0
        %v557 = vld [vmem:[%s330] sm:$0xff]
        %v558 = vld [vmem:[%s330 + $0x8] sm:$0xff]
        %v559 = vld [vmem:[#allocation2] sm:$0xf]
        %v560 = vld [vmem:[#allocation2 + $0x4] sm:$0xf]
        %v561 = vld [vmem:[#allocation2 + $0x8] sm:$0xf]
        %v562 = vld [vmem:[#allocation2 + $0xc] sm:$0xf]
        %v563 = vld [vmem:[#allocation2 + $0x10] sm:$0xf]
        %v564 = vld [vmem:[#allocation2 + $0x14] sm:$0xf]
        %v565 = vld [vmem:[#allocation2 + $0x18] sm:$0xf]
        %v566 = vld [vmem:[#allocation2 + $0x1c] sm:$0xf]
        %v567 = vld [vmem:[#allocation2 + $0x20] sm:$0xf]
        %v568 = vld [vmem:[#allocation2 + $0x24] sm:$0xf]
        %v569 = vld [vmem:[#allocation2 + $0x28] sm:$0xf]
        %v570 = vld [vmem:[#allocation2 + $0x2c] sm:$0xf]
        %v571 = vld [vmem:[#allocation2 + $0x30] sm:$0xf]
        %v572 = vld [vmem:[#allocation2 + $0x34] sm:$0xf]
        %v573 = vld [vmem:[#allocation2 + $0x38] sm:$0xf]
        %v574 = vld [vmem:[#allocation2 + $0x3c] sm:$0xf]
        %v575 = vld [vmem:[#allocation2 + $0x40] sm:$0xf]
        %v576 = vld [vmem:[#allocation2 + $0x44] sm:$0xf]
        %v579 = vunpack.c.l.b16 %v557
        %v580 = vunpack.c.h.b16 %v557
        %v581 = vunpack.c.l.b16 %v558
        %v582 = vunpack.c.h.b16 %v558
        %v583 = vpack.c.b16 %v581, %v579
        %v584 = vpack.c.b16 %v582, %v580
        %v604 = vunpack.c.l.b16 %v559
        %v605 = vunpack.c.l.b16 %v560
        %v606 = vunpack.c.l.b16 %v561
        %v607 = vunpack.c.l.b16 %v562
        %v608 = vunpack.c.l.b16 %v563
        %v609 = vunpack.c.l.b16 %v564
        %v610 = vunpack.c.l.b16 %v565
        %v611 = vunpack.c.l.b16 %v566
        %v612 = vunpack.c.l.b16 %v567
        %v613 = vunpack.c.l.b16 %v568
        %v614 = vunpack.c.l.b16 %v569
        %v615 = vunpack.c.l.b16 %v570
        %v616 = vunpack.c.l.b16 %v571
        %v617 = vunpack.c.l.b16 %v572
        %v618 = vunpack.c.l.b16 %v573
        %v619 = vunpack.c.l.b16 %v574
        %v620 = vunpack.c.l.b16 %v575
        %v621 = vunpack.c.l.b16 %v576
        %v622 = vpack.c.b16 %v605, %v604
        %v623 = vpack.c.b16 %v607, %v606
        %v624 = vpack.c.b16 %v609, %v608
        %v625 = vpack.c.b16 %v611, %v610
        %v626 = vpack.c.b16 %v613, %v612
        %v627 = vpack.c.b16 %v615, %v614
        %v628 = vpack.c.b16 %v617, %v616
        %v629 = vpack.c.b16 %v619, %v618
        %v630 = vpack.c.b16 %v621, %v620
        %vm640 = vcmask 130048
        %v642 = vsel %vm640, %v584, 0
        %644 = vmatpush.bf16.msra.mxu0 %v629
        %645 = vmatpush.bf16.msra.mxu0 %v628
        %646 = vmatpush.bf16.msra.mxu0 %v627
        %647 = vmatpush.bf16.msra.mxu0 %v626
        %648 = vmatpush.bf16.msra.mxu0 %v625
        %649 = vmatpush.bf16.msra.mxu0 %v624
        %650 = vmatpush.bf16.msra.mxu0 %v623
        %651 = vmatpush.bf16.msra.mxu0 %v622
        %652 = vmatmul.bf16.gmra.mxu0 %v583
        %v653 = vpop.f32.mrf.mxu0
        %v654 = vadd.f32 0.0, %v653
        %v655 = vpop.f32.mrf.mxu0
        %v656 = vadd.f32 0.0, %v655
        %657 = vdwg.mxu0
        %658 = vmatpush.bf16.msra.mxu0 0
        %659 = vmatpush.bf16.msra.mxu0 0
        %660 = vmatpush.bf16.msra.mxu0 0
        %661 = vmatpush.bf16.msra.mxu0 0
        %662 = vmatpush.bf16.msra.mxu0 0
        %663 = vmatpush.bf16.msra.mxu0 0
        %664 = vmatpush.bf16.msra.mxu0 0
        %665 = vmatpush.bf16.msra.mxu0 %v630
        %666 = vmatmul.bf16.gmra.mxu0 %v642
        %v667 = vpop.f32.mrf.mxu0
        %v668 = vadd.f32 %v654, %v667
        %v669 = vpop.f32.mrf.mxu0
        %v670 = vadd.f32 %v656, %v669
        %671 = vdwg.mxu0
        %v672 = vadd.f32 %v553, %v668
        %v673 = vadd.f32 %v555, %v670
        %v674 = vld [vmem:[%s330] sm:$0xff]
        %v675 = vld [vmem:[%s330 + $0x8] sm:$0xff]
        %v676 = vld [vmem:[%s330 + $0x10] sm:$0x11]
        %s677 = scalar_lea.vmem [#allocation2], 72
        %v678 = vld [vmem:[%s677] sm:$0xf]
        %v679 = vld [vmem:[%s677 + $0x4] sm:$0xf]
        %v680 = vld [vmem:[%s677 + $0x8] sm:$0xf]
        %v681 = vld [vmem:[%s677 + $0xc] sm:$0xf]
        %v682 = vld [vmem:[%s677 + $0x10] sm:$0xf]
        %v683 = vld [vmem:[%s677 + $0x14] sm:$0xf]
        %v684 = vld [vmem:[%s677 + $0x18] sm:$0xf]
        %v685 = vld [vmem:[%s677 + $0x1c] sm:$0xf]
        %v686 = vld [vmem:[%s677 + $0x20] sm:$0xf]
        %v687 = vld [vmem:[%s677 + $0x24] sm:$0xf]
        %v688 = vld [vmem:[%s677 + $0x28] sm:$0xf]
        %v689 = vld [vmem:[%s677 + $0x2c] sm:$0xf]
        %v690 = vld [vmem:[%s677 + $0x30] sm:$0xf]
        %v691 = vld [vmem:[%s677 + $0x34] sm:$0xf]
        %v692 = vld [vmem:[%s677 + $0x38] sm:$0xf]
        %v693 = vld [vmem:[%s677 + $0x3c] sm:$0xf]
        %v694 = vld [vmem:[%s677 + $0x40] sm:$0xf]
        %v695 = vld [vmem:[%s677 + $0x44] sm:$0xf]
        %v699 = vunpack.c.l.b16 %v674
        %v700 = vunpack.c.h.b16 %v674
        %v701 = vunpack.c.l.b16 %v675
        %v702 = vunpack.c.h.b16 %v675
        %v703 = vunpack.c.l.b16 %v676
        %v704 = vunpack.c.h.b16 %v676
        %v705 = vpack.c.b16 %v701, %v699
        %v706 = vpack.c.b16 %v702, %v700
        %v707 = vpack.c.b16 %v703, %v703
        %v708 = vpack.c.b16 %v704, %v704
        %vm709 = vsmask.f32 7424
        %v711 = vshrl.u32 %v705, 16
        %v713 = vshll.u32 %v705, 16
        %v715 = vrot.slane %v713, 1
        %v716 = vor.u32 %v711, %v715
        %v718 = vshll.u32 %v707, 16
        %v720 = vrot.slane %v718, 1
        %v721 = vsel %vm709, %v716, %v720
        %v723 = vshrl.u32 %v706, 16
        %v725 = vshll.u32 %v706, 16
        %v727 = vrot.slane %v725, 1
        %v728 = vor.u32 %v723, %v727
        %v730 = vshll.u32 %v708, 16
        %v732 = vrot.slane %v730, 1
        %v733 = vsel %vm709, %v728, %v732
        %v753 = vunpack.c.l.b16 %v678
        %v754 = vunpack.c.l.b16 %v679
        %v755 = vunpack.c.l.b16 %v680
        %v756 = vunpack.c.l.b16 %v681
        %v757 = vunpack.c.l.b16 %v682
        %v758 = vunpack.c.l.b16 %v683
        %v759 = vunpack.c.l.b16 %v684
        %v760 = vunpack.c.l.b16 %v685
        %v761 = vunpack.c.l.b16 %v686
        %v762 = vunpack.c.l.b16 %v687
        %v763 = vunpack.c.l.b16 %v688
        %v764 = vunpack.c.l.b16 %v689
        %v765 = vunpack.c.l.b16 %v690
        %v766 = vunpack.c.l.b16 %v691
        %v767 = vunpack.c.l.b16 %v692
        %v768 = vunpack.c.l.b16 %v693
        %v769 = vunpack.c.l.b16 %v694
        %v770 = vunpack.c.l.b16 %v695
        %v771 = vpack.c.b16 %v754, %v753
        %v772 = vpack.c.b16 %v756, %v755
        %v773 = vpack.c.b16 %v758, %v757
        %v774 = vpack.c.b16 %v760, %v759
        %v775 = vpack.c.b16 %v762, %v761
        %v776 = vpack.c.b16 %v764, %v763
        %v777 = vpack.c.b16 %v766, %v765
        %v778 = vpack.c.b16 %v768, %v767
        %v779 = vpack.c.b16 %v770, %v769
        %v790 = vsel %vm640, %v733, 0
        %792 = vmatpush.bf16.msra.mxu0 %v778
        %793 = vmatpush.bf16.msra.mxu0 %v777
        %794 = vmatpush.bf16.msra.mxu0 %v776
        %795 = vmatpush.bf16.msra.mxu0 %v775
        %796 = vmatpush.bf16.msra.mxu0 %v774
        %797 = vmatpush.bf16.msra.mxu0 %v773
        %798 = vmatpush.bf16.msra.mxu0 %v772
        %799 = vmatpush.bf16.msra.mxu0 %v771
        %800 = vmatmul.bf16.gmra.mxu0 %v721
        %v801 = vpop.f32.mrf.mxu0
        %v802 = vadd.f32 0.0, %v801
        %v803 = vpop.f32.mrf.mxu0
        %v804 = vadd.f32 0.0, %v803
        %805 = vdwg.mxu0
        %806 = vmatpush.bf16.msra.mxu0 0
        %807 = vmatpush.bf16.msra.mxu0 0
        %808 = vmatpush.bf16.msra.mxu0 0
        %809 = vmatpush.bf16.msra.mxu0 0
        %810 = vmatpush.bf16.msra.mxu0 0
        %811 = vmatpush.bf16.msra.mxu0 0
        %812 = vmatpush.bf16.msra.mxu0 0
        %813 = vmatpush.bf16.msra.mxu0 %v779
        %814 = vmatmul.bf16.gmra.mxu0 %v790
        %v815 = vpop.f32.mrf.mxu0
        %v816 = vadd.f32 %v802, %v815
        %v817 = vpop.f32.mrf.mxu0
        %v818 = vadd.f32 %v804, %v817
        %819 = vdwg.mxu0
        %v820 = vadd.f32 %v672, %v816
        %v821 = vadd.f32 %v673, %v818
        %v822 = vld [vmem:[%s330] sm:$0xee]
        %s823 = scalar_lea.vmem [#allocation2], 144
        %v824 = vld [vmem:[%s823] sm:$0xf]
        %v825 = vld [vmem:[%s823 + $0x4] sm:$0xf]
        %v826 = vld [vmem:[%s823 + $0x8] sm:$0xf]
        %v827 = vld [vmem:[%s823 + $0xc] sm:$0xf]
        %v828 = vld [vmem:[%s823 + $0x10] sm:$0xf]
        %v829 = vld [vmem:[%s823 + $0x14] sm:$0xf]
        %v830 = vld [vmem:[%s823 + $0x18] sm:$0xf]
        %v831 = vld [vmem:[%s823 + $0x1c] sm:$0xf]
        %v832 = vld [vmem:[%s823 + $0x20] sm:$0xf]
        %v833 = vld [vmem:[%s823 + $0x24] sm:$0xf]
        %v834 = vld [vmem:[%s823 + $0x28] sm:$0xf]
        %v835 = vld [vmem:[%s823 + $0x2c] sm:$0xf]
        %v836 = vld [vmem:[%s823 + $0x30] sm:$0xf]
        %v837 = vld [vmem:[%s823 + $0x34] sm:$0xf]
        %v838 = vld [vmem:[%s823 + $0x38] sm:$0xf]
        %v839 = vld [vmem:[%s823 + $0x3c] sm:$0xf]
        %v840 = vld [vmem:[%s823 + $0x40] sm:$0xf]
        %v841 = vld [vmem:[%s823 + $0x44] sm:$0xf]
        %v843 = vunpack.c.l.b16 %v822
        %v844 = vunpack.c.h.b16 %v822
        %v845 = vpack.c.b16 %v701, %v843
        %v846 = vpack.c.b16 %v702, %v844
        %vm847 = vcmask 1046528
        %v848 = vrot.slane %v845, 1
        %v849 = vrot.slane %v707, 1
        %v850 = vsel %vm847, %v848, %v849
        %v851 = vrot.slane %v846, 1
        %v852 = vrot.slane %v708, 1
        %v853 = vsel %vm847, %v851, %v852
        %v873 = vunpack.c.l.b16 %v824
        %v874 = vunpack.c.l.b16 %v825
        %v875 = vunpack.c.l.b16 %v826
        %v876 = vunpack.c.l.b16 %v827
        %v877 = vunpack.c.l.b16 %v828
        %v878 = vunpack.c.l.b16 %v829
        %v879 = vunpack.c.l.b16 %v830
        %v880 = vunpack.c.l.b16 %v831
        %v881 = vunpack.c.l.b16 %v832
        %v882 = vunpack.c.l.b16 %v833
        %v883 = vunpack.c.l.b16 %v834
        %v884 = vunpack.c.l.b16 %v835
        %v885 = vunpack.c.l.b16 %v836
        %v886 = vunpack.c.l.b16 %v837
        %v887 = vunpack.c.l.b16 %v838
        %v888 = vunpack.c.l.b16 %v839
        %v889 = vunpack.c.l.b16 %v840
        %v890 = vunpack.c.l.b16 %v841
        %v891 = vpack.c.b16 %v874, %v873
        %v892 = vpack.c.b16 %v876, %v875
        %v893 = vpack.c.b16 %v878, %v877
        %v894 = vpack.c.b16 %v880, %v879
        %v895 = vpack.c.b16 %v882, %v881
        %v896 = vpack.c.b16 %v884, %v883
        %v897 = vpack.c.b16 %v886, %v885
        %v898 = vpack.c.b16 %v888, %v887
        %v899 = vpack.c.b16 %v890, %v889
        %v910 = vsel %vm640, %v853, 0
        %912 = vmatpush.bf16.msra.mxu0 %v898
        %913 = vmatpush.bf16.msra.mxu0 %v897
        %914 = vmatpush.bf16.msra.mxu0 %v896
        %915 = vmatpush.bf16.msra.mxu0 %v895
        %916 = vmatpush.bf16.msra.mxu0 %v894
        %917 = vmatpush.bf16.msra.mxu0 %v893
        %918 = vmatpush.bf16.msra.mxu0 %v892
        %919 = vmatpush.bf16.msra.mxu0 %v891
        %920 = vmatmul.bf16.gmra.mxu0 %v850
        %v921 = vpop.f32.mrf.mxu0
        %v922 = vadd.f32 0.0, %v921
        %v923 = vpop.f32.mrf.mxu0
        %v924 = vadd.f32 0.0, %v923
        %925 = vdwg.mxu0
        %926 = vmatpush.bf16.msra.mxu0 0
        %927 = vmatpush.bf16.msra.mxu0 0
        %928 = vmatpush.bf16.msra.mxu0 0
        %929 = vmatpush.bf16.msra.mxu0 0
        %930 = vmatpush.bf16.msra.mxu0 0
        %931 = vmatpush.bf16.msra.mxu0 0
        %932 = vmatpush.bf16.msra.mxu0 0
        %933 = vmatpush.bf16.msra.mxu0 %v899
        %934 = vmatmul.bf16.gmra.mxu0 %v910
        %v935 = vpop.f32.mrf.mxu0
        %v936 = vadd.f32 %v922, %v935
        %v937 = vpop.f32.mrf.mxu0
        %v938 = vadd.f32 %v924, %v937
        %939 = vdwg.mxu0
        %v940 = vadd.f32 %v820, %v936
        %v941 = vadd.f32 %v821, %v938
        %942 = vst [vmem:[%s320] sm:$0xff] %v940
        %943 = vst [vmem:[%s320 + $0x8] sm:$0xff] %v941
        %s944 = sand.u32 %s188, 1
        %s945 = scalar_lea.sflag [#allocation4], %s944
        %s946 = sand.u32 %s188, 1
        %s947 = smul.addr %s946, 16
        %s948 = scalar_lea.vmem [#allocation7], %s947
        // Predicated region
        $region57: #{tpu_custom_call.1} parent=47 // pred_check
          %p949 = pneg %p198
        $region58: #{tpu_custom_call.1} parent=47 // pred_check_branch
          %951 = sbr.rel (%p949) target = $region60
        $region59: #{tpu_custom_call.1} parent=47 // pred_region
          %953 = vsyncadd %s945, 0
          %s954 = smul.addr %s23, 2
          %s955 = smul.addr %s954, 8
          %s956 = scalar_lea.hbm %s7, %s955
          %s957 = sshll.u32 %s948, 4
          %s958 = int_to_ptr.vmem [resolvable:$true] %s957
          %s959 = sshll.u32 %s956, 4
          %s960 = int_to_ptr.hbm [resolvable:$true] %s959
          %965 = dma.vmem_to_hbm [thread:$0]  %s958, 256, %s960, %s945, 128, 128, 8
        $region60: #{tpu_custom_call.1} parent=47 // pred_fallthru
          _
      $region48: #{tpu_custom_call.1} parent=5 // pred_fallthru
        _
      %p966 = scmp.le.s32.totalorder 2, %s18
      // Predicated region
      $region61: #{tpu_custom_call.1} parent=5 // pred_check
        %p967 = pneg %p966
      $region62: #{tpu_custom_call.1} parent=5 // pred_check_branch
        %969 = sbr.rel (%p967) target = $region64
      $region63: #{tpu_custom_call.1} parent=5 // pred_region
        %s970 = ssub.s32 %s18, 2
        // Predicated region
        $region65: #{tpu_custom_call.1} parent=63 // pred_check
          %p971 = pneg %p204
        $region66: #{tpu_custom_call.1} parent=63 // pred_check_branch
          %973 = sbr.rel (%p971) target = $region68
        $region67: #{tpu_custom_call.1} parent=63 // pred_region
          %s974 = sand.u32 %s189, 1
          %s975 = scalar_lea.sflag [#allocation4], %s974
          %s976 = sand.u32 %s189, 1
          %s977 = smul.addr %s976, 16
          %s978 = scalar_lea.vmem [#allocation7], %s977
          %980 = dma.done %s975, 256
        $region68: #{tpu_custom_call.1} parent=63 // pred_fallthru
          _
      $region64: #{tpu_custom_call.1} parent=5 // pred_fallthru
        _
    $region6: #{tpu_custom_call.1} parent=1 // loop_footer
      %s22 = sadd.s32 1, %s18
    $region7: #{tpu_custom_call.1} parent=1 // loop_footer_branch
      %17 = sbr.rel target = $region3
    $region8: #{tpu_custom_call.1} parent=1 // loop_exit
      _
    %981 = vsyncpa [#allocation3], 1
    %s982 = scalar_lea.sflag [#allocation3], 1
    %983 = vsyncpa %s982, 1
    %984 = vsyncpa [#allocation6], 1
    %985 = vsyncpa [#allocation4], 1
    %s986 = scalar_lea.sflag [#allocation4], 1
    %987 = vsyncpa %s986, 1

</llo_original>
